<compile_context>
chip_gen: v7x
topology: tpu7x:2x2x1
jax: 0.10.0
libtpu: 0.0.40
codegen_flags: <defaults>
</compile_context>

<pallas_src>
import jax
import jax.numpy as jnp
from jax.experimental import pallas as pl
from jax.experimental.pallas import tpu as pltpu


def _lstm_decoder_kernel(
    x_ref, attn_ref,
    wx_ref,            # (H, 8H) bf16: [cell0 gates | cell1 gates], gate order [i,f,o,g]
    whh1_ref,          # (H, 4H) bf16, gate order [i,f,o,g]
    b0_ref, b1_ref,    # (1, 4H) f32 fused biases (bih + bhh), gate order [i,f,o,g]
    wm0_ref, bm0_ref,  # midfc['ft']: (H, H) bf16, (1, H) f32
    wm1_ref, bm1_ref,  # midfc['zm']: (H, H) bf16, (1, H) f32
    out_ft_ref, out_zm_ref,
):
    """Whole forward pass in one VMEM-resident invocation (B, H are small)."""
    H = attn_ref.shape[1]
    attn = attn_ref[...].astype(jnp.float32)
    x_bf = x_ref[...].astype(jnp.bfloat16)

    # Both cells' x-contributions from one fused (B, H) @ (H, 8H) MXU dot, f32 accum.
    gx = jnp.dot(x_bf, wx_ref[...], preferred_element_type=jnp.float32)

    def gates_to_hc(pre, c_prev):
        # Gate order [i, f, o, g]: one wide sigmoid (B, 3H) + one tanh (B, H), all f32.
        s = jax.nn.sigmoid(pre[:, : 3 * H])
        g = jnp.tanh(pre[:, 3 * H:])
        i, f, o = s[:, :H], s[:, H:2 * H], s[:, 2 * H:]
        c_new = f * c_prev + i * g
        h_new = o * jnp.tanh(c_new)
        return h_new, c_new

    # Cell 0 ('ft'): h_prev == 0, so the h @ whh0 matmul vanishes; bhh0 lives inside b0.
    h1, c1 = gates_to_hc(gx[:, : 4 * H] + b0_ref[...], attn)

    # Cell 1 ('zm'): initial state (h1, c1) propagated via hidden_list.
    pre1 = (
        gx[:, 4 * H:]
        + jnp.dot(h1.astype(jnp.bfloat16), whh1_ref[...],
                  preferred_element_type=jnp.float32)
        + b1_ref[...]
    )
    h2, _ = gates_to_hc(pre1, c1)

    # midfc heads.
    out_ft_ref[...] = (
        jnp.dot(h1.astype(jnp.bfloat16), wm0_ref[...],
                preferred_element_type=jnp.float32) + bm0_ref[...]
    ).astype(out_ft_ref.dtype)
    out_zm_ref[...] = (
        jnp.dot(h2.astype(jnp.bfloat16), wm1_ref[...],
                preferred_element_type=jnp.float32) + bm1_ref[...]
    ).astype(out_zm_ref.dtype)


@jax.jit
def lstm_decoder_forward(x, attn, prep):
    """prep: dict of prepared (fused / permuted / bf16) weights, see prepare_params."""
    B, H = x.shape
    operands = (
        x, attn,
        prep["wx"], prep["whh1"], prep["b0"], prep["b1"],
        prep["wm0"], prep["bm0"], prep["wm1"], prep["bm1"],
    )
    # Single-buffered footprint + slack.  For the real model (H=768, bf16 weights,
    # whh0 dropped) this is ~16 MiB — well under v7x's 64 MiB physical VMEM.
    in_bytes = sum(int(op.size) * op.dtype.itemsize for op in operands)
    out_bytes = 2 * B * H * 4
    vmem_limit = min(2 * (in_bytes + out_bytes) + (4 << 20), 96 << 20)

    vmem = pltpu.MemorySpace.VMEM
    out_ft, out_zm = pl.pallas_call(
        _lstm_decoder_kernel,
        out_shape=(
            jax.ShapeDtypeStruct((B, H), jnp.float32),
            jax.ShapeDtypeStruct((B, H), jnp.float32),
        ),
        # No grid: single invocation, no pipeline, no double-buffered weight copies.
        in_specs=[pl.BlockSpec(memory_space=vmem) for _ in operands],
        out_specs=(pl.BlockSpec(memory_space=vmem),
                   pl.BlockSpec(memory_space=vmem)),
        compiler_params=pltpu.CompilerParams(vmem_limit_bytes=vmem_limit),
    )(*operands)
    return {"ft": out_ft, "zm": out_zm}


def init_params(key, H):
    """Deterministic synthetic init, PyTorch-style U(-1/sqrt(H), 1/sqrt(H)).

    Stored pre-transposed to (in_features, out_features); gate column order follows
    PyTorch LSTMCell: [input, forget, cell(g), output]."""
    bound = 1.0 / jnp.sqrt(jnp.float32(H))
    keys = jax.random.split(key, 12)
    u = lambda k, shape: jax.random.uniform(
        k, shape, jnp.float32, minval=-bound, maxval=bound)
    return {
        # LSTMCell 0 ('ft')
        "wih0": u(keys[0], (H, 4 * H)), "whh0": u(keys[1], (H, 4 * H)),
        "bih0": u(keys[2], (1, 4 * H)), "bhh0": u(keys[3], (1, 4 * H)),
        # LSTMCell 1 ('zm')
        "wih1": u(keys[4], (H, 4 * H)), "whh1": u(keys[5], (H, 4 * H)),
        "bih1": u(keys[6], (1, 4 * H)), "bhh1": u(keys[7], (1, 4 * H)),
        # midfc heads
        "wm0": u(keys[8], (H, H)), "bm0": u(keys[9], (1, H)),
        "wm1": u(keys[10], (H, H)), "bm1": u(keys[11], (1, H)),
    }


def _permute_gates_ifog(w):
    """Columns [i | f | g | o] (PyTorch order) -> [i | f | o | g]."""
    i, f, g, o = jnp.split(w, 4, axis=-1)
    return jnp.concatenate([i, f, o, g], axis=-1)


def prepare_params(p):
    """Offline param prep: fuse biases, concat wih0|wih1, permute gates, cast weights bf16.

    whh0 is intentionally dropped: the initial hidden state h0 is identically zero, so
    h0 @ whh0 contributes nothing (bhh0 is still added via the fused bias b0)."""
    wih0 = _permute_gates_ifog(p["wih0"])
    wih1 = _permute_gates_ifog(p["wih1"])
    return {
        "wx": jnp.concatenate([wih0, wih1], axis=-1).astype(jnp.bfloat16),  # (H, 8H)
        "whh1": _permute_gates_ifog(p["whh1"]).astype(jnp.bfloat16),
        "b0": _permute_gates_ifog(p["bih0"] + p["bhh0"]).astype(jnp.float32),
        "b1": _permute_gates_ifog(p["bih1"] + p["bhh1"]).astype(jnp.float32),
        "wm0": p["wm0"].astype(jnp.bfloat16), "bm0": p["bm0"].astype(jnp.float32),
        "wm1": p["wm1"].astype(jnp.bfloat16), "bm1": p["bm1"].astype(jnp.float32),
    }


def _reference_forward_f32(x, attn, p):
    """Pure-JAX f32 reference of the original PyTorch math (gate order [i,f,g,o])."""
    H = x.shape[1]

    def cell(xv, hv, cv, wih, whh, bih, bhh):
        g = xv @ wih + hv @ whh + bih + bhh
        i = jax.nn.sigmoid(g[:, :H])
        f = jax.nn.sigmoid(g[:, H:2 * H])
        gg = jnp.tanh(g[:, 2 * H:3 * H])
        o = jax.nn.sigmoid(g[:, 3 * H:])
        c = f * cv + i * gg
        return o * jnp.tanh(c), c

    h1, c1 = cell(x, jnp.zeros_like(x), attn,
                  p["wih0"], p["whh0"], p["bih0"], p["bhh0"])
    h2, _ = cell(x, h1, c1, p["wih1"], p["whh1"], p["bih1"], p["bhh1"])
    return {"ft": h1 @ p["wm0"] + p["bm0"], "zm": h2 @ p["wm1"] + p["bm1"]}


def _reference_forward_bf16(x, attn, prep):
    """Pure-JAX reference mirroring the kernel's exact bf16-weight / f32-accum math."""
    H = attn.shape[1]

    def act(pre, c_prev):
        i = jax.nn.sigmoid(pre[:, :H])
        f = jax.nn.sigmoid(pre[:, H:2 * H])
        o = jax.nn.sigmoid(pre[:, 2 * H:3 * H])
        g = jnp.tanh(pre[:, 3 * H:])
        c = f * c_prev + i * g
        return o * jnp.tanh(c), c

    gx = jnp.dot(x.astype(jnp.bfloat16), prep["wx"], preferred_element_type=jnp.float32)
    h1, c1 = act(gx[:, :4 * H] + prep["b0"], attn)
    pre1 = (gx[:, 4 * H:]
            + jnp.dot(h1.astype(jnp.bfloat16), prep["whh1"],
                      preferred_element_type=jnp.float32)
            + prep["b1"])
    h2, _ = act(pre1, c1)
    ft = jnp.dot(h1.astype(jnp.bfloat16), prep["wm0"],
                 preferred_element_type=jnp.float32) + prep["bm0"]
    zm = jnp.dot(h2.astype(jnp.bfloat16), prep["wm1"],
                 preferred_element_type=jnp.float32) + prep["bm1"]
    return {"ft": ft, "zm": zm}


if __name__ == "__main__":
    B, H = 8, 128  # small hidden-size stand-in for the module's default 768
    key = jax.random.PRNGKey(0)
    kx, kattn, kparams = jax.random.split(key, 3)
    x = jax.random.normal(kx, (B, H), jnp.float32)
    attn = jax.random.normal(kattn, (B, H), jnp.float32)
    raw = init_params(kparams, H)
    prep = prepare_params(raw)

    outputs = lstm_decoder_forward(x, attn, prep)
    jax.block_until_ready(outputs)

    ref_exact = _reference_forward_bf16(x, attn, prep)
    ref_f32 = _reference_forward_f32(x, attn, raw)
    for name in ("ft", "zm"):
        assert outputs[name].shape == (B, H)
        # Tight: kernel matches its own bf16-weight / f32-accumulation math.
        assert jnp.allclose(outputs[name], ref_exact[name], atol=1e-4, rtol=1e-4), name
        # Loose: bf16 weight path stays close to the full-f32 PyTorch math.
        assert jnp.allclose(outputs[name], ref_f32[name], atol=2e-2, rtol=2e-2), name

    print("KERNEL_OK")
</pallas_src>

<mosaic_0001>
module attributes {stable_mosaic.version = 11 : i64} {
  func.func @_lstm_decoder_kernel(%arg0: memref<8x128xf32, #tpu.memory_space<vmem>>, %arg1: memref<8x128xf32, #tpu.memory_space<vmem>>, %arg2: memref<128x1024xbf16, #tpu.memory_space<vmem>>, %arg3: memref<128x512xbf16, #tpu.memory_space<vmem>>, %arg4: memref<1x512xf32, #tpu.memory_space<vmem>>, %arg5: memref<1x512xf32, #tpu.memory_space<vmem>>, %arg6: memref<128x128xbf16, #tpu.memory_space<vmem>>, %arg7: memref<1x128xf32, #tpu.memory_space<vmem>>, %arg8: memref<128x128xbf16, #tpu.memory_space<vmem>>, %arg9: memref<1x128xf32, #tpu.memory_space<vmem>>, %arg10: memref<8x128xf32, #tpu.memory_space<vmem>>, %arg11: memref<8x128xf32, #tpu.memory_space<vmem>>) attributes {dimension_semantics = [], scalar_prefetch = 0 : i64, scratch_operands = 0 : i64, tpu.core_type = #tpu.core_type<tc>} {
    %c0 = arith.constant 0 : index
    %c0_0 = arith.constant 0 : index
    %0 = vector.load %arg1[%c0, %c0_0] : memref<8x128xf32, #tpu.memory_space<vmem>>, vector<8x128xf32>
    %c0_1 = arith.constant 0 : index
    %c0_2 = arith.constant 0 : index
    %1 = vector.load %arg0[%c0_1, %c0_2] : memref<8x128xf32, #tpu.memory_space<vmem>>, vector<8x128xf32>
    %2 = arith.truncf %1 : vector<8x128xf32> to vector<8x128xbf16>
    %c0_3 = arith.constant 0 : index
    %c0_4 = arith.constant 0 : index
    %3 = vector.load %arg2[%c0_3, %c0_4] : memref<128x1024xbf16, #tpu.memory_space<vmem>>, vector<128x1024xbf16>
    %cst = arith.constant dense<0.000000e+00> : vector<8x1024xf32>
    %4 = tpu.matmul %2, %3, %cst {dimension_numbers = #tpu.dot_dimension_numbers<[1], [0], [0], [1], [0, 0, 1, 1], [], []>} : vector<8x128xbf16>, vector<128x1024xbf16>, vector<8x1024xf32> -> vector<8x1024xf32>
    %5 = vector.extract_strided_slice %4 {offsets = [0, 0], sizes = [8, 512], strides = [1, 1]} : vector<8x1024xf32> to vector<8x512xf32>
    %c0_5 = arith.constant 0 : index
    %c0_6 = arith.constant 0 : index
    %6 = vector.load %arg4[%c0_5, %c0_6] : memref<1x512xf32, #tpu.memory_space<vmem>>, vector<1x512xf32>
    %7 = vector.broadcast %6 : vector<1x512xf32> to vector<8x512xf32>
    %8 = arith.addf %5, %7 : vector<8x512xf32>
    %9 = vector.extract_strided_slice %8 {offsets = [0, 0], sizes = [8, 384], strides = [1, 1]} : vector<8x512xf32> to vector<8x384xf32>
    %10 = arith.negf %9 : vector<8x384xf32>
    %11 = math.exp %10 : vector<8x384xf32>
    %cst_7 = arith.constant 1.000000e+00 : f32
    %12 = vector.broadcast %cst_7 : f32 to vector<8x384xf32>
    %13 = arith.addf %12, %11 : vector<8x384xf32>
    %14 = arith.divf %12, %13 : vector<8x384xf32>
    %15 = vector.extract_strided_slice %8 {offsets = [0, 384], sizes = [8, 128], strides = [1, 1]} : vector<8x512xf32> to vector<8x128xf32>
    %16 = math.tanh %15 : vector<8x128xf32>
    %17 = vector.extract_strided_slice %14 {offsets = [0, 0], sizes = [8, 128], strides = [1, 1]} : vector<8x384xf32> to vector<8x128xf32>
    %18 = vector.extract_strided_slice %14 {offsets = [0, 128], sizes = [8, 128], strides = [1, 1]} : vector<8x384xf32> to vector<8x128xf32>
    %19 = vector.extract_strided_slice %14 {offsets = [0, 256], sizes = [8, 128], strides = [1, 1]} : vector<8x384xf32> to vector<8x128xf32>
    %20 = arith.mulf %18, %0 : vector<8x128xf32>
    %21 = arith.mulf %17, %16 : vector<8x128xf32>
    %22 = arith.addf %20, %21 : vector<8x128xf32>
    %23 = math.tanh %22 : vector<8x128xf32>
    %24 = arith.mulf %19, %23 : vector<8x128xf32>
    %25 = vector.extract_strided_slice %4 {offsets = [0, 512], sizes = [8, 512], strides = [1, 1]} : vector<8x1024xf32> to vector<8x512xf32>
    %26 = arith.truncf %24 : vector<8x128xf32> to vector<8x128xbf16>
    %c0_8 = arith.constant 0 : index
    %c0_9 = arith.constant 0 : index
    %27 = vector.load %arg3[%c0_8, %c0_9] : memref<128x512xbf16, #tpu.memory_space<vmem>>, vector<128x512xbf16>
    %cst_10 = arith.constant dense<0.000000e+00> : vector<8x512xf32>
    %28 = tpu.matmul %26, %27, %cst_10 {dimension_numbers = #tpu.dot_dimension_numbers<[1], [0], [0], [1], [0, 0, 1, 1], [], []>} : vector<8x128xbf16>, vector<128x512xbf16>, vector<8x512xf32> -> vector<8x512xf32>
    %29 = arith.addf %25, %28 : vector<8x512xf32>
    %c0_11 = arith.constant 0 : index
    %c0_12 = arith.constant 0 : index
    %30 = vector.load %arg5[%c0_11, %c0_12] : memref<1x512xf32, #tpu.memory_space<vmem>>, vector<1x512xf32>
    %31 = vector.broadcast %30 : vector<1x512xf32> to vector<8x512xf32>
    %32 = arith.addf %29, %31 : vector<8x512xf32>
    %33 = vector.extract_strided_slice %32 {offsets = [0, 0], sizes = [8, 384], strides = [1, 1]} : vector<8x512xf32> to vector<8x384xf32>
    %34 = arith.negf %33 : vector<8x384xf32>
    %35 = math.exp %34 : vector<8x384xf32>
    %cst_13 = arith.constant 1.000000e+00 : f32
    %36 = vector.broadcast %cst_13 : f32 to vector<8x384xf32>
    %37 = arith.addf %36, %35 : vector<8x384xf32>
    %38 = arith.divf %36, %37 : vector<8x384xf32>
    %39 = vector.extract_strided_slice %32 {offsets = [0, 384], sizes = [8, 128], strides = [1, 1]} : vector<8x512xf32> to vector<8x128xf32>
    %40 = math.tanh %39 : vector<8x128xf32>
    %41 = vector.extract_strided_slice %38 {offsets = [0, 0], sizes = [8, 128], strides = [1, 1]} : vector<8x384xf32> to vector<8x128xf32>
    %42 = vector.extract_strided_slice %38 {offsets = [0, 128], sizes = [8, 128], strides = [1, 1]} : vector<8x384xf32> to vector<8x128xf32>
    %43 = vector.extract_strided_slice %38 {offsets = [0, 256], sizes = [8, 128], strides = [1, 1]} : vector<8x384xf32> to vector<8x128xf32>
    %44 = arith.mulf %42, %22 : vector<8x128xf32>
    %45 = arith.mulf %41, %40 : vector<8x128xf32>
    %46 = arith.addf %44, %45 : vector<8x128xf32>
    %47 = math.tanh %46 : vector<8x128xf32>
    %48 = arith.mulf %43, %47 : vector<8x128xf32>
    %49 = arith.truncf %24 : vector<8x128xf32> to vector<8x128xbf16>
    %c0_14 = arith.constant 0 : index
    %c0_15 = arith.constant 0 : index
    %50 = vector.load %arg6[%c0_14, %c0_15] : memref<128x128xbf16, #tpu.memory_space<vmem>>, vector<128x128xbf16>
    %cst_16 = arith.constant dense<0.000000e+00> : vector<8x128xf32>
    %51 = tpu.matmul %49, %50, %cst_16 {dimension_numbers = #tpu.dot_dimension_numbers<[1], [0], [0], [1], [0, 0, 1, 1], [], []>} : vector<8x128xbf16>, vector<128x128xbf16>, vector<8x128xf32> -> vector<8x128xf32>
    %c0_17 = arith.constant 0 : index
    %c0_18 = arith.constant 0 : index
    %52 = vector.load %arg7[%c0_17, %c0_18] : memref<1x128xf32, #tpu.memory_space<vmem>>, vector<1x128xf32>
    %53 = vector.broadcast %52 : vector<1x128xf32> to vector<8x128xf32>
    %54 = arith.addf %51, %53 : vector<8x128xf32>
    %c0_19 = arith.constant 0 : index
    %c0_20 = arith.constant 0 : index
    %55 = vector.load %arg10[%c0_19, %c0_20] : memref<8x128xf32, #tpu.memory_space<vmem>>, vector<8x128xf32>
    tpu.vector_store %arg10[%c0_19, %c0_20], %54 {strides = array<i32>} : memref<8x128xf32, #tpu.memory_space<vmem>>, vector<8x128xf32>,
    %56 = arith.truncf %48 : vector<8x128xf32> to vector<8x128xbf16>
    %c0_21 = arith.constant 0 : index
    %c0_22 = arith.constant 0 : index
    %57 = vector.load %arg8[%c0_21, %c0_22] : memref<128x128xbf16, #tpu.memory_space<vmem>>, vector<128x128xbf16>
    %cst_23 = arith.constant dense<0.000000e+00> : vector<8x128xf32>
    %58 = tpu.matmul %56, %57, %cst_23 {dimension_numbers = #tpu.dot_dimension_numbers<[1], [0], [0], [1], [0, 0, 1, 1], [], []>} : vector<8x128xbf16>, vector<128x128xbf16>, vector<8x128xf32> -> vector<8x128xf32>
    %c0_24 = arith.constant 0 : index
    %c0_25 = arith.constant 0 : index
    %59 = vector.load %arg9[%c0_24, %c0_25] : memref<1x128xf32, #tpu.memory_space<vmem>>, vector<1x128xf32>
    %60 = vector.broadcast %59 : vector<1x128xf32> to vector<8x128xf32>
    %61 = arith.addf %58, %60 : vector<8x128xf32>
    %c0_26 = arith.constant 0 : index
    %c0_27 = arith.constant 0 : index
    %62 = vector.load %arg11[%c0_26, %c0_27] : memref<8x128xf32, #tpu.memory_space<vmem>>, vector<8x128xf32>
    tpu.vector_store %arg11[%c0_26, %c0_27], %61 {strides = array<i32>} : memref<8x128xf32, #tpu.memory_space<vmem>>, vector<8x128xf32>,
    return
  }
}

</mosaic_0001>

<llo_original>
// kernel: lstm_decoder_forward.1
$region0: #{lstm_decoder_forward.1}
  #allocation0 [shape = 'u32[]', space=smem, size = 0x4, offset = 0x4, fixed_abs, tag = 'smem constant byte address 0x4 - core index']
  #allocation1 [shape = 'u32[144,128]{1,0:T(1,128)}', space=vmem, size = 0x12000, scoped, tag = 'internal scratch']
  %s0 = inlined_call_operand.hbm [shape: f32[8,128], index: 0, kind: input, shape index: {}]
  %s1 = inlined_call_operand.hbm [shape: f32[8,128], index: 1, kind: input, shape index: {}]
  %s2 = inlined_call_operand.hbm [shape: bf16[128,1024], index: 2, kind: input, shape index: {}]
  %s3 = inlined_call_operand.hbm [shape: bf16[128,512], index: 3, kind: input, shape index: {}]
  %s4 = inlined_call_operand.vmem [shape: f32[1,512], index: 4, kind: input, shape index: {}]
  %s5 = inlined_call_operand.vmem [shape: f32[1,512], index: 5, kind: input, shape index: {}]
  %s6 = inlined_call_operand.hbm [shape: bf16[128,128], index: 6, kind: input, shape index: {}]
  %s7 = inlined_call_operand.vmem [shape: f32[1,128], index: 7, kind: input, shape index: {}]
  %s8 = inlined_call_operand.hbm [shape: bf16[128,128], index: 8, kind: input, shape index: {}]
  %s9 = inlined_call_operand.vmem [shape: f32[1,128], index: 9, kind: input, shape index: {}]
  %s10 = inlined_call_operand.hbm [shape: f32[8,128], index: 10, kind: output, shape index: {0}]
  %s11 = inlined_call_operand.hbm [shape: f32[8,128], index: 11, kind: output, shape index: {1}]
  %12 = xla_tuple %s10, %s11
  %s13 = sld [smem:[#allocation0]]
  $region82: #{lstm_decoder_forward.1} parent=0
    _
  %s15 = ssub.s32 1, %s13
  %s16 = scalar_select 0, %s15, %s13
  $region1: #{lstm_decoder_forward.1} parent=0
    #allocation2 [shape = 'u8[4096]{0}', space=vmem, size = 0x1000, scoped, tag = 'input window, operand 0, single buffered']
    #allocation3 [shape = 's32[1]{0}', space=sflag, size = 0x4, scoped, tag = 'scoped memory for lstm_decoder_forward.1']
    #allocation4 [shape = 's32[1]{0}', space=sflag, size = 0x4, scoped, tag = 'scoped memory for lstm_decoder_forward.1']
    #allocation5 [shape = 'u8[4096]{0}', space=vmem, size = 0x1000, scoped, tag = 'input window, operand 1, single buffered']
    #allocation6 [shape = 's32[1]{0}', space=sflag, size = 0x4, scoped, tag = 'scoped memory for lstm_decoder_forward.1']
    #allocation7 [shape = 'u8[262144]{0}', space=vmem, size = 0x40000, scoped, tag = 'input window, operand 2, single buffered']
    #allocation8 [shape = 'u8[131072]{0}', space=vmem, size = 0x20000, scoped, tag = 'input window, operand 3, single buffered']
    #allocation9 [shape = 's32[1]{0}', space=sflag, size = 0x4, scoped, tag = 'scoped memory for lstm_decoder_forward.1']
    #allocation10 [shape = 'u8[32768]{0}', space=vmem, size = 0x8000, scoped, tag = 'input window, operand 6, single buffered']
    #allocation11 [shape = 'u8[32768]{0}', space=vmem, size = 0x8000, scoped, tag = 'input window, operand 8, single buffered']
    #allocation12 [shape = 's32[1]{0}', space=sflag, size = 0x4, scoped, tag = 'scoped memory for lstm_decoder_forward.1']
    #allocation13 [shape = 'u8[4096]{0}', space=vmem, size = 0x1000, scoped, tag = 'output window, operand 0, single buffered']
    #allocation14 [shape = 'u8[4096]{0}', space=vmem, size = 0x1000, scoped, tag = 'output window, operand 1, single buffered']
    #allocation15 [shape = 's32[1]{0}', space=sflag, size = 0x4, scoped, tag = 'scoped memory for lstm_decoder_forward.1']
    %17 = vsyncpa [#allocation3], 0
    %18 = vsyncpa [#allocation6], 0
    %19 = vsyncpa [#allocation9], 0
    %20 = vsyncpa [#allocation12], 0
    %21 = vsyncpa [#allocation4], 0
    %22 = vsyncpa [#allocation15], 0
    // Predicated region
    $region2: #{lstm_decoder_forward.1} parent=1 // pred_check
      _
    $region3: #{lstm_decoder_forward.1} parent=1 // pred_check_branch
      %24 = sbr.rel (0) target = $region5
    $region4: #{lstm_decoder_forward.1} parent=1 // pred_region
      %s26 = ssub.s32 128, 128
      %27 = vsyncadd [#allocation3], %s26
      %s29 = sshll.u32 [#allocation2], 4
      %s30 = int_to_ptr.vmem [resolvable:$true] %s29
      %32 = dma.hbm_to_vmem [thread:$0]  %s0, 128, %s30, [#allocation3]
    $region5: #{lstm_decoder_forward.1} parent=1 // pred_fallthru
      _
    // Predicated region
    $region6: #{lstm_decoder_forward.1} parent=1 // pred_check
      _
    $region7: #{lstm_decoder_forward.1} parent=1 // pred_check_branch
      %34 = sbr.rel (0) target = $region9
    $region8: #{lstm_decoder_forward.1} parent=1 // pred_region
      %s36 = ssub.s32 128, 128
      %37 = vsyncadd [#allocation6], %s36
      %s39 = sshll.u32 [#allocation5], 4
      %s40 = int_to_ptr.vmem [resolvable:$true] %s39
      %42 = dma.hbm_to_vmem [thread:$0]  %s1, 128, %s40, [#allocation6]
    $region9: #{lstm_decoder_forward.1} parent=1 // pred_fallthru
      _
    // Predicated region
    $region10: #{lstm_decoder_forward.1} parent=1 // pred_check
      _
    $region11: #{lstm_decoder_forward.1} parent=1 // pred_check_branch
      %44 = sbr.rel (0) target = $region13
    $region12: #{lstm_decoder_forward.1} parent=1 // pred_region
      %s46 = ssub.s32 8192, 8192
      %47 = vsyncadd [#allocation6], %s46
      %s48 = sshll.u32 [#allocation7], 4
      %s49 = int_to_ptr.vmem [resolvable:$true] %s48
      %54 = dma.hbm_to_vmem [thread:$0]  %s2, 8192, %s49, [#allocation6], 512, 512, 32
    $region13: #{lstm_decoder_forward.1} parent=1 // pred_fallthru
      _
    // Predicated region
    $region14: #{lstm_decoder_forward.1} parent=1 // pred_check
      _
    $region15: #{lstm_decoder_forward.1} parent=1 // pred_check_branch
      %56 = sbr.rel (0) target = $region17
    $region16: #{lstm_decoder_forward.1} parent=1 // pred_region
      %s58 = ssub.s32 4096, 4096
      %59 = vsyncadd [#allocation9], %s58
      %s60 = sshll.u32 [#allocation8], 4
      %s61 = int_to_ptr.vmem [resolvable:$true] %s60
      %66 = dma.hbm_to_vmem [thread:$0]  %s3, 4096, %s61, [#allocation9], 256, 256, 16
    $region17: #{lstm_decoder_forward.1} parent=1 // pred_fallthru
      _
    // Predicated region
    $region18: #{lstm_decoder_forward.1} parent=1 // pred_check
      _
    $region19: #{lstm_decoder_forward.1} parent=1 // pred_check_branch
      %68 = sbr.rel (0) target = $region21
    $region20: #{lstm_decoder_forward.1} parent=1 // pred_region
      _
    $region21: #{lstm_decoder_forward.1} parent=1 // pred_fallthru
      _
    // Predicated region
    $region22: #{lstm_decoder_forward.1} parent=1 // pred_check
      _
    $region23: #{lstm_decoder_forward.1} parent=1 // pred_check_branch
      %70 = sbr.rel (0) target = $region25
    $region24: #{lstm_decoder_forward.1} parent=1 // pred_region
      _
    $region25: #{lstm_decoder_forward.1} parent=1 // pred_fallthru
      _
    // Predicated region
    $region26: #{lstm_decoder_forward.1} parent=1 // pred_check
      _
    $region27: #{lstm_decoder_forward.1} parent=1 // pred_check_branch
      %72 = sbr.rel (0) target = $region29
    $region28: #{lstm_decoder_forward.1} parent=1 // pred_region
      %s74 = ssub.s32 1024, 1024
      %75 = vsyncadd [#allocation9], %s74
      %s76 = sshll.u32 [#allocation10], 4
      %s77 = int_to_ptr.vmem [resolvable:$true] %s76
      %82 = dma.hbm_to_vmem [thread:$0]  %s6, 1024, %s77, [#allocation9], 64, 64, 4
    $region29: #{lstm_decoder_forward.1} parent=1 // pred_fallthru
      _
    // Predicated region
    $region30: #{lstm_decoder_forward.1} parent=1 // pred_check
      _
    $region31: #{lstm_decoder_forward.1} parent=1 // pred_check_branch
      %84 = sbr.rel (0) target = $region33
    $region32: #{lstm_decoder_forward.1} parent=1 // pred_region
      _
    $region33: #{lstm_decoder_forward.1} parent=1 // pred_fallthru
      _
    // Predicated region
    $region34: #{lstm_decoder_forward.1} parent=1 // pred_check
      _
    $region35: #{lstm_decoder_forward.1} parent=1 // pred_check_branch
      %86 = sbr.rel (0) target = $region37
    $region36: #{lstm_decoder_forward.1} parent=1 // pred_region
      %s88 = ssub.s32 1024, 1024
      %89 = vsyncadd [#allocation12], %s88
      %s90 = sshll.u32 [#allocation11], 4
      %s91 = int_to_ptr.vmem [resolvable:$true] %s90
      %96 = dma.hbm_to_vmem [thread:$0]  %s8, 1024, %s91, [#allocation12], 64, 64, 4
    $region37: #{lstm_decoder_forward.1} parent=1 // pred_fallthru
      _
    // Predicated region
    $region38: #{lstm_decoder_forward.1} parent=1 // pred_check
      _
    $region39: #{lstm_decoder_forward.1} parent=1 // pred_check_branch
      %98 = sbr.rel (0) target = $region41
    $region40: #{lstm_decoder_forward.1} parent=1 // pred_region
      _
    $region41: #{lstm_decoder_forward.1} parent=1 // pred_fallthru
      _
    // Predicated region
    $region42: #{lstm_decoder_forward.1} parent=1 // pred_check
      _
    $region43: #{lstm_decoder_forward.1} parent=1 // pred_check_branch
      %100 = sbr.rel (0) target = $region45
    $region44: #{lstm_decoder_forward.1} parent=1 // pred_region
      %101 = dma.done [#allocation3], 128
    $region45: #{lstm_decoder_forward.1} parent=1 // pred_fallthru
      _
    // Predicated region
    $region46: #{lstm_decoder_forward.1} parent=1 // pred_check
      _
    $region47: #{lstm_decoder_forward.1} parent=1 // pred_check_branch
      %103 = sbr.rel (0) target = $region49
    $region48: #{lstm_decoder_forward.1} parent=1 // pred_region
      %104 = dma.done [#allocation6], 128
    $region49: #{lstm_decoder_forward.1} parent=1 // pred_fallthru
      _
    // Predicated region
    $region50: #{lstm_decoder_forward.1} parent=1 // pred_check
      _
    $region51: #{lstm_decoder_forward.1} parent=1 // pred_check_branch
      %106 = sbr.rel (0) target = $region53
    $region52: #{lstm_decoder_forward.1} parent=1 // pred_region
      %107 = dma.done [#allocation6], 8192
    $region53: #{lstm_decoder_forward.1} parent=1 // pred_fallthru
      _
    // Predicated region
    $region54: #{lstm_decoder_forward.1} parent=1 // pred_check
      _
    $region55: #{lstm_decoder_forward.1} parent=1 // pred_check_branch
      %109 = sbr.rel (0) target = $region57
    $region56: #{lstm_decoder_forward.1} parent=1 // pred_region
      %110 = dma.done [#allocation9], 4096
    $region57: #{lstm_decoder_forward.1} parent=1 // pred_fallthru
      _
    // Predicated region
    $region58: #{lstm_decoder_forward.1} parent=1 // pred_check
      _
    $region59: #{lstm_decoder_forward.1} parent=1 // pred_check_branch
      %112 = sbr.rel (0) target = $region61
    $region60: #{lstm_decoder_forward.1} parent=1 // pred_region
      %113 = dma.done [#allocation9], 1024
    $region61: #{lstm_decoder_forward.1} parent=1 // pred_fallthru
      _
    // Predicated region
    $region62: #{lstm_decoder_forward.1} parent=1 // pred_check
      _
    $region63: #{lstm_decoder_forward.1} parent=1 // pred_check_branch
      %115 = sbr.rel (0) target = $region65
    $region64: #{lstm_decoder_forward.1} parent=1 // pred_region
      %116 = dma.done [#allocation12], 1024
    $region65: #{lstm_decoder_forward.1} parent=1 // pred_fallthru
      _
    %v118 = vld [vmem:[#allocation5] sm:$0xff]
    %v119 = vld [vmem:[#allocation2] sm:$0xff]
    %v120 = vpack.c.bf16 %v119, %v119
    %v121 = vld [vmem:[#allocation7] sm:$0xff]
    %v122 = vld [vmem:[#allocation7 + $0x8] sm:$0xff]
    %v123 = vld [vmem:[#allocation7 + $0x10] sm:$0xff]
    %v124 = vld [vmem:[#allocation7 + $0x18] sm:$0xff]
    %v125 = vld [vmem:[#allocation7 + $0x20] sm:$0xff]
    %v126 = vld [vmem:[#allocation7 + $0x28] sm:$0xff]
    %v127 = vld [vmem:[#allocation7 + $0x30] sm:$0xff]
    %v128 = vld [vmem:[#allocation7 + $0x38] sm:$0xff]
    %v129 = vld [vmem:[#allocation7 + $0x40] sm:$0xff]
    %v130 = vld [vmem:[#allocation7 + $0x48] sm:$0xff]
    %v131 = vld [vmem:[#allocation7 + $0x50] sm:$0xff]
    %v132 = vld [vmem:[#allocation7 + $0x58] sm:$0xff]
    %v133 = vld [vmem:[#allocation7 + $0x60] sm:$0xff]
    %v134 = vld [vmem:[#allocation7 + $0x68] sm:$0xff]
    %v135 = vld [vmem:[#allocation7 + $0x70] sm:$0xff]
    %v136 = vld [vmem:[#allocation7 + $0x78] sm:$0xff]
    %v137 = vld [vmem:[#allocation7 + $0x80] sm:$0xff]
    %v138 = vld [vmem:[#allocation7 + $0x88] sm:$0xff]
    %v139 = vld [vmem:[#allocation7 + $0x90] sm:$0xff]
    %v140 = vld [vmem:[#allocation7 + $0x98] sm:$0xff]
    %v141 = vld [vmem:[#allocation7 + $0xa0] sm:$0xff]
    %v142 = vld [vmem:[#allocation7 + $0xa8] sm:$0xff]
    %v143 = vld [vmem:[#allocation7 + $0xb0] sm:$0xff]
    %v144 = vld [vmem:[#allocation7 + $0xb8] sm:$0xff]
    %v145 = vld [vmem:[#allocation7 + $0xc0] sm:$0xff]
    %v146 = vld [vmem:[#allocation7 + $0xc8] sm:$0xff]
    %v147 = vld [vmem:[#allocation7 + $0xd0] sm:$0xff]
    %v148 = vld [vmem:[#allocation7 + $0xd8] sm:$0xff]
    %v149 = vld [vmem:[#allocation7 + $0xe0] sm:$0xff]
    %v150 = vld [vmem:[#allocation7 + $0xe8] sm:$0xff]
    %v151 = vld [vmem:[#allocation7 + $0xf0] sm:$0xff]
    %v152 = vld [vmem:[#allocation7 + $0xf8] sm:$0xff]
    %v153 = vld [vmem:[#allocation7 + $0x100] sm:$0xff]
    %v154 = vld [vmem:[#allocation7 + $0x108] sm:$0xff]
    %v155 = vld [vmem:[#allocation7 + $0x110] sm:$0xff]
    %v156 = vld [vmem:[#allocation7 + $0x118] sm:$0xff]
    %v157 = vld [vmem:[#allocation7 + $0x120] sm:$0xff]
    %v158 = vld [vmem:[#allocation7 + $0x128] sm:$0xff]
    %v159 = vld [vmem:[#allocation7 + $0x130] sm:$0xff]
    %v160 = vld [vmem:[#allocation7 + $0x138] sm:$0xff]
    %v161 = vld [vmem:[#allocation7 + $0x140] sm:$0xff]
    %v162 = vld [vmem:[#allocation7 + $0x148] sm:$0xff]
    %v163 = vld [vmem:[#allocation7 + $0x150] sm:$0xff]
    %v164 = vld [vmem:[#allocation7 + $0x158] sm:$0xff]
    %v165 = vld [vmem:[#allocation7 + $0x160] sm:$0xff]
    %v166 = vld [vmem:[#allocation7 + $0x168] sm:$0xff]
    %v167 = vld [vmem:[#allocation7 + $0x170] sm:$0xff]
    %v168 = vld [vmem:[#allocation7 + $0x178] sm:$0xff]
    %v169 = vld [vmem:[#allocation7 + $0x180] sm:$0xff]
    %v170 = vld [vmem:[#allocation7 + $0x188] sm:$0xff]
    %v171 = vld [vmem:[#allocation7 + $0x190] sm:$0xff]
    %v172 = vld [vmem:[#allocation7 + $0x198] sm:$0xff]
    %v173 = vld [vmem:[#allocation7 + $0x1a0] sm:$0xff]
    %v174 = vld [vmem:[#allocation7 + $0x1a8] sm:$0xff]
    %v175 = vld [vmem:[#allocation7 + $0x1b0] sm:$0xff]
    %v176 = vld [vmem:[#allocation7 + $0x1b8] sm:$0xff]
    %v177 = vld [vmem:[#allocation7 + $0x1c0] sm:$0xff]
    %v178 = vld [vmem:[#allocation7 + $0x1c8] sm:$0xff]
    %v179 = vld [vmem:[#allocation7 + $0x1d0] sm:$0xff]
    %v180 = vld [vmem:[#allocation7 + $0x1d8] sm:$0xff]
    %v181 = vld [vmem:[#allocation7 + $0x1e0] sm:$0xff]
    %v182 = vld [vmem:[#allocation7 + $0x1e8] sm:$0xff]
    %v183 = vld [vmem:[#allocation7 + $0x1f0] sm:$0xff]
    %v184 = vld [vmem:[#allocation7 + $0x1f8] sm:$0xff]
    %v249 = vunpack.c.l.b16 %v121
    %v250 = vunpack.c.h.b16 %v121
    %v251 = vunpack.c.l.b16 %v122
    %v252 = vunpack.c.h.b16 %v122
    %v253 = vunpack.c.l.b16 %v123
    %v254 = vunpack.c.h.b16 %v123
    %v255 = vunpack.c.l.b16 %v124
    %v256 = vunpack.c.h.b16 %v124
    %v257 = vunpack.c.l.b16 %v125
    %v258 = vunpack.c.h.b16 %v125
    %v259 = vunpack.c.l.b16 %v126
    %v260 = vunpack.c.h.b16 %v126
    %v261 = vunpack.c.l.b16 %v127
    %v262 = vunpack.c.h.b16 %v127
    %v263 = vunpack.c.l.b16 %v128
    %v264 = vunpack.c.h.b16 %v128
    %v265 = vunpack.c.l.b16 %v129
    %v266 = vunpack.c.h.b16 %v129
    %v267 = vunpack.c.l.b16 %v130
    %v268 = vunpack.c.h.b16 %v130
    %v269 = vunpack.c.l.b16 %v131
    %v270 = vunpack.c.h.b16 %v131
    %v271 = vunpack.c.l.b16 %v132
    %v272 = vunpack.c.h.b16 %v132
    %v273 = vunpack.c.l.b16 %v133
    %v274 = vunpack.c.h.b16 %v133
    %v275 = vunpack.c.l.b16 %v134
    %v276 = vunpack.c.h.b16 %v134
    %v277 = vunpack.c.l.b16 %v135
    %v278 = vunpack.c.h.b16 %v135
    %v279 = vunpack.c.l.b16 %v136
    %v280 = vunpack.c.h.b16 %v136
    %v281 = vunpack.c.l.b16 %v137
    %v282 = vunpack.c.h.b16 %v137
    %v283 = vunpack.c.l.b16 %v138
    %v284 = vunpack.c.h.b16 %v138
    %v285 = vunpack.c.l.b16 %v139
    %v286 = vunpack.c.h.b16 %v139
    %v287 = vunpack.c.l.b16 %v140
    %v288 = vunpack.c.h.b16 %v140
    %v289 = vunpack.c.l.b16 %v141
    %v290 = vunpack.c.h.b16 %v141
    %v291 = vunpack.c.l.b16 %v142
    %v292 = vunpack.c.h.b16 %v142
    %v293 = vunpack.c.l.b16 %v143
    %v294 = vunpack.c.h.b16 %v143
    %v295 = vunpack.c.l.b16 %v144
    %v296 = vunpack.c.h.b16 %v144
    %v297 = vunpack.c.l.b16 %v145
    %v298 = vunpack.c.h.b16 %v145
    %v299 = vunpack.c.l.b16 %v146
    %v300 = vunpack.c.h.b16 %v146
    %v301 = vunpack.c.l.b16 %v147
    %v302 = vunpack.c.h.b16 %v147
    %v303 = vunpack.c.l.b16 %v148
    %v304 = vunpack.c.h.b16 %v148
    %v305 = vunpack.c.l.b16 %v149
    %v306 = vunpack.c.h.b16 %v149
    %v307 = vunpack.c.l.b16 %v150
    %v308 = vunpack.c.h.b16 %v150
    %v309 = vunpack.c.l.b16 %v151
    %v310 = vunpack.c.h.b16 %v151
    %v311 = vunpack.c.l.b16 %v152
    %v312 = vunpack.c.h.b16 %v152
    %v313 = vunpack.c.l.b16 %v153
    %v314 = vunpack.c.h.b16 %v153
    %v315 = vunpack.c.l.b16 %v154
    %v316 = vunpack.c.h.b16 %v154
    %v317 = vunpack.c.l.b16 %v155
    %v318 = vunpack.c.h.b16 %v155
    %v319 = vunpack.c.l.b16 %v156
    %v320 = vunpack.c.h.b16 %v156
    %v321 = vunpack.c.l.b16 %v157
    %v322 = vunpack.c.h.b16 %v157
    %v323 = vunpack.c.l.b16 %v158
    %v324 = vunpack.c.h.b16 %v158
    %v325 = vunpack.c.l.b16 %v159
    %v326 = vunpack.c.h.b16 %v159
    %v327 = vunpack.c.l.b16 %v160
    %v328 = vunpack.c.h.b16 %v160
    %v329 = vunpack.c.l.b16 %v161
    %v330 = vunpack.c.h.b16 %v161
    %v331 = vunpack.c.l.b16 %v162
    %v332 = vunpack.c.h.b16 %v162
    %v333 = vunpack.c.l.b16 %v163
    %v334 = vunpack.c.h.b16 %v163
    %v335 = vunpack.c.l.b16 %v164
    %v336 = vunpack.c.h.b16 %v164
    %v337 = vunpack.c.l.b16 %v165
    %v338 = vunpack.c.h.b16 %v165
    %v339 = vunpack.c.l.b16 %v166
    %v340 = vunpack.c.h.b16 %v166
    %v341 = vunpack.c.l.b16 %v167
    %v342 = vunpack.c.h.b16 %v167
    %v343 = vunpack.c.l.b16 %v168
    %v344 = vunpack.c.h.b16 %v168
    %v345 = vunpack.c.l.b16 %v169
    %v346 = vunpack.c.h.b16 %v169
    %v347 = vunpack.c.l.b16 %v170
    %v348 = vunpack.c.h.b16 %v170
    %v349 = vunpack.c.l.b16 %v171
    %v350 = vunpack.c.h.b16 %v171
    %v351 = vunpack.c.l.b16 %v172
    %v352 = vunpack.c.h.b16 %v172
    %v353 = vunpack.c.l.b16 %v173
    %v354 = vunpack.c.h.b16 %v173
    %v355 = vunpack.c.l.b16 %v174
    %v356 = vunpack.c.h.b16 %v174
    %v357 = vunpack.c.l.b16 %v175
    %v358 = vunpack.c.h.b16 %v175
    %v359 = vunpack.c.l.b16 %v176
    %v360 = vunpack.c.h.b16 %v176
    %v361 = vunpack.c.l.b16 %v177
    %v362 = vunpack.c.h.b16 %v177
    %v363 = vunpack.c.l.b16 %v178
    %v364 = vunpack.c.h.b16 %v178
    %v365 = vunpack.c.l.b16 %v179
    %v366 = vunpack.c.h.b16 %v179
    %v367 = vunpack.c.l.b16 %v180
    %v368 = vunpack.c.h.b16 %v180
    %v369 = vunpack.c.l.b16 %v181
    %v370 = vunpack.c.h.b16 %v181
    %v371 = vunpack.c.l.b16 %v182
    %v372 = vunpack.c.h.b16 %v182
    %v373 = vunpack.c.l.b16 %v183
    %v374 = vunpack.c.h.b16 %v183
    %v375 = vunpack.c.l.b16 %v184
    %v376 = vunpack.c.h.b16 %v184
    %v377 = vpack.c.b16 %v257, %v249
    %v378 = vpack.c.b16 %v258, %v250
    %v379 = vpack.c.b16 %v259, %v251
    %v380 = vpack.c.b16 %v260, %v252
    %v381 = vpack.c.b16 %v261, %v253
    %v382 = vpack.c.b16 %v262, %v254
    %v383 = vpack.c.b16 %v263, %v255
    %v384 = vpack.c.b16 %v264, %v256
    %v385 = vpack.c.b16 %v273, %v265
    %v386 = vpack.c.b16 %v274, %v266
    %v387 = vpack.c.b16 %v275, %v267
    %v388 = vpack.c.b16 %v276, %v268
    %v389 = vpack.c.b16 %v277, %v269
    %v390 = vpack.c.b16 %v278, %v270
    %v391 = vpack.c.b16 %v279, %v271
    %v392 = vpack.c.b16 %v280, %v272
    %v393 = vpack.c.b16 %v289, %v281
    %v394 = vpack.c.b16 %v290, %v282
    %v395 = vpack.c.b16 %v291, %v283
    %v396 = vpack.c.b16 %v292, %v284
    %v397 = vpack.c.b16 %v293, %v285
    %v398 = vpack.c.b16 %v294, %v286
    %v399 = vpack.c.b16 %v295, %v287
    %v400 = vpack.c.b16 %v296, %v288
    %v401 = vpack.c.b16 %v305, %v297
    %v402 = vpack.c.b16 %v306, %v298
    %v403 = vpack.c.b16 %v307, %v299
    %v404 = vpack.c.b16 %v308, %v300
    %v405 = vpack.c.b16 %v309, %v301
    %v406 = vpack.c.b16 %v310, %v302
    %v407 = vpack.c.b16 %v311, %v303
    %v408 = vpack.c.b16 %v312, %v304
    %v409 = vpack.c.b16 %v321, %v313
    %v410 = vpack.c.b16 %v322, %v314
    %v411 = vpack.c.b16 %v323, %v315
    %v412 = vpack.c.b16 %v324, %v316
    %v413 = vpack.c.b16 %v325, %v317
    %v414 = vpack.c.b16 %v326, %v318
    %v415 = vpack.c.b16 %v327, %v319
    %v416 = vpack.c.b16 %v328, %v320
    %v417 = vpack.c.b16 %v337, %v329
    %v418 = vpack.c.b16 %v338, %v330
    %v419 = vpack.c.b16 %v339, %v331
    %v420 = vpack.c.b16 %v340, %v332
    %v421 = vpack.c.b16 %v341, %v333
    %v422 = vpack.c.b16 %v342, %v334
    %v423 = vpack.c.b16 %v343, %v335
    %v424 = vpack.c.b16 %v344, %v336
    %v425 = vpack.c.b16 %v353, %v345
    %v426 = vpack.c.b16 %v354, %v346
    %v427 = vpack.c.b16 %v355, %v347
    %v428 = vpack.c.b16 %v356, %v348
    %v429 = vpack.c.b16 %v357, %v349
    %v430 = vpack.c.b16 %v358, %v350
    %v431 = vpack.c.b16 %v359, %v351
    %v432 = vpack.c.b16 %v360, %v352
    %v433 = vpack.c.b16 %v369, %v361
    %v434 = vpack.c.b16 %v370, %v362
    %v435 = vpack.c.b16 %v371, %v363
    %v436 = vpack.c.b16 %v372, %v364
    %v437 = vpack.c.b16 %v373, %v365
    %v438 = vpack.c.b16 %v374, %v366
    %v439 = vpack.c.b16 %v375, %v367
    %v440 = vpack.c.b16 %v376, %v368
    %505 = vmatprep.subr.bf16.mxu0 %v378
    %506 = vmatpush1.bf16.msra.mxu0 %v377
    %507 = vmatprep.subr.bf16.mxu0 %v386
    %508 = vmatpush1.bf16.msra.mxu0 %v385
    %509 = vmatprep.subr.bf16.mxu0 %v394
    %510 = vmatpush1.bf16.msra.mxu0 %v393
    %511 = vmatprep.subr.bf16.mxu0 %v402
    %512 = vmatpush1.bf16.msra.mxu0 %v401
    %513 = vmatprep.subr.bf16.mxu0 %v410
    %514 = vmatpush1.bf16.msra.mxu0 %v409
    %515 = vmatprep.subr.bf16.mxu0 %v418
    %516 = vmatpush1.bf16.msra.mxu0 %v417
    %517 = vmatprep.subr.bf16.mxu0 %v426
    %518 = vmatpush1.bf16.msra.mxu0 %v425
    %519 = vmatprep.subr.bf16.mxu0 %v434
    %520 = vmatpush1.bf16.msra.mxu0 %v433
    %521 = vmatprep.subr.bf16.mxu0 0
    %522 = vmatpush1.bf16.msra.mxu0 0
    %523 = vmatprep.subr.bf16.mxu0 0
    %524 = vmatpush1.bf16.msra.mxu0 0
    %525 = vmatprep.subr.bf16.mxu0 0
    %526 = vmatpush1.bf16.msra.mxu0 0
    %527 = vmatprep.subr.bf16.mxu0 0
    %528 = vmatpush1.bf16.msra.mxu0 0
    %529 = vmatprep.subr.bf16.mxu0 0
    %530 = vmatpush1.bf16.msra.mxu0 0
    %531 = vmatprep.subr.bf16.mxu0 0
    %532 = vmatpush1.bf16.msra.mxu0 0
    %533 = vmatprep.subr.bf16.mxu0 0
    %534 = vmatpush1.bf16.msra.mxu0 0
    %535 = vmatprep.subr.bf16.mxu0 0
    %536 = vmatpush1.bf16.msra.mxu0 0
    %537 = vmatprep.mubr.bf16.mxu0 0
    %538 = vmatmul.mubr.bf16.gmra.mrb[0].mxu0 %v120
    %v539 = vpop.f32.mrb[0].mxu0
    %v540 = vadd.f32 0.0, %v539
    %v541 = vpop.f32.mrb[0].mxu0
    %v542 = vadd.f32 0.0, %v541
    %v543 = vpop.f32.mrb[0].mxu0
    %v544 = vpop.f32.mrb[0].mxu0
    %545 = vdwg.mxu0
    %546 = vmatprep.subr.bf16.mxu0 %v380
    %547 = vmatpush1.bf16.msra.mxu0 %v379
    %548 = vmatprep.subr.bf16.mxu0 %v388
    %549 = vmatpush1.bf16.msra.mxu0 %v387
    %550 = vmatprep.subr.bf16.mxu0 %v396
    %551 = vmatpush1.bf16.msra.mxu0 %v395
    %552 = vmatprep.subr.bf16.mxu0 %v404
    %553 = vmatpush1.bf16.msra.mxu0 %v403
    %554 = vmatprep.subr.bf16.mxu0 %v412
    %555 = vmatpush1.bf16.msra.mxu0 %v411
    %556 = vmatprep.subr.bf16.mxu0 %v420
    %557 = vmatpush1.bf16.msra.mxu0 %v419
    %558 = vmatprep.subr.bf16.mxu0 %v428
    %559 = vmatpush1.bf16.msra.mxu0 %v427
    %560 = vmatprep.subr.bf16.mxu0 %v436
    %561 = vmatpush1.bf16.msra.mxu0 %v435
    %562 = vmatprep.subr.bf16.mxu0 0
    %563 = vmatpush1.bf16.msra.mxu0 0
    %564 = vmatprep.subr.bf16.mxu0 0
    %565 = vmatpush1.bf16.msra.mxu0 0
    %566 = vmatprep.subr.bf16.mxu0 0
    %567 = vmatpush1.bf16.msra.mxu0 0
    %568 = vmatprep.subr.bf16.mxu0 0
    %569 = vmatpush1.bf16.msra.mxu0 0
    %570 = vmatprep.subr.bf16.mxu0 0
    %571 = vmatpush1.bf16.msra.mxu0 0
    %572 = vmatprep.subr.bf16.mxu0 0
    %573 = vmatpush1.bf16.msra.mxu0 0
    %574 = vmatprep.subr.bf16.mxu0 0
    %575 = vmatpush1.bf16.msra.mxu0 0
    %576 = vmatprep.subr.bf16.mxu0 0
    %577 = vmatpush1.bf16.msra.mxu0 0
    %578 = vmatprep.mubr.bf16.mxu0 0
    %579 = vmatmul.mubr.bf16.gmra.mrb[0].mxu0 %v120
    %v580 = vpop.f32.mrb[0].mxu0
    %v581 = vadd.f32 0.0, %v580
    %v582 = vpop.f32.mrb[0].mxu0
    %v583 = vadd.f32 0.0, %v582
    %v584 = vpop.f32.mrb[0].mxu0
    %v585 = vpop.f32.mrb[0].mxu0
    %586 = vdwg.mxu0
    %587 = vmatprep.subr.bf16.mxu0 %v382
    %588 = vmatpush1.bf16.msra.mxu0 %v381
    %589 = vmatprep.subr.bf16.mxu0 %v390
    %590 = vmatpush1.bf16.msra.mxu0 %v389
    %591 = vmatprep.subr.bf16.mxu0 %v398
    %592 = vmatpush1.bf16.msra.mxu0 %v397
    %593 = vmatprep.subr.bf16.mxu0 %v406
    %594 = vmatpush1.bf16.msra.mxu0 %v405
    %595 = vmatprep.subr.bf16.mxu0 %v414
    %596 = vmatpush1.bf16.msra.mxu0 %v413
    %597 = vmatprep.subr.bf16.mxu0 %v422
    %598 = vmatpush1.bf16.msra.mxu0 %v421
    %599 = vmatprep.subr.bf16.mxu0 %v430
    %600 = vmatpush1.bf16.msra.mxu0 %v429
    %601 = vmatprep.subr.bf16.mxu0 %v438
    %602 = vmatpush1.bf16.msra.mxu0 %v437
    %603 = vmatprep.subr.bf16.mxu0 0
    %604 = vmatpush1.bf16.msra.mxu0 0
    %605 = vmatprep.subr.bf16.mxu0 0
    %606 = vmatpush1.bf16.msra.mxu0 0
    %607 = vmatprep.subr.bf16.mxu0 0
    %608 = vmatpush1.bf16.msra.mxu0 0
    %609 = vmatprep.subr.bf16.mxu0 0
    %610 = vmatpush1.bf16.msra.mxu0 0
    %611 = vmatprep.subr.bf16.mxu0 0
    %612 = vmatpush1.bf16.msra.mxu0 0
    %613 = vmatprep.subr.bf16.mxu0 0
    %614 = vmatpush1.bf16.msra.mxu0 0
    %615 = vmatprep.subr.bf16.mxu0 0
    %616 = vmatpush1.bf16.msra.mxu0 0
    %617 = vmatprep.subr.bf16.mxu0 0
    %618 = vmatpush1.bf16.msra.mxu0 0
    %619 = vmatprep.mubr.bf16.mxu0 0
    %620 = vmatmul.mubr.bf16.gmra.mrb[0].mxu0 %v120
    %v621 = vpop.f32.mrb[0].mxu0
    %v622 = vadd.f32 0.0, %v621
    %v623 = vpop.f32.mrb[0].mxu0
    %v624 = vadd.f32 0.0, %v623
    %v625 = vpop.f32.mrb[0].mxu0
    %v626 = vpop.f32.mrb[0].mxu0
    %627 = vdwg.mxu0
    %628 = vmatprep.subr.bf16.mxu0 %v384
    %629 = vmatpush1.bf16.msra.mxu0 %v383
    %630 = vmatprep.subr.bf16.mxu0 %v392
    %631 = vmatpush1.bf16.msra.mxu0 %v391
    %632 = vmatprep.subr.bf16.mxu0 %v400
    %633 = vmatpush1.bf16.msra.mxu0 %v399
    %634 = vmatprep.subr.bf16.mxu0 %v408
    %635 = vmatpush1.bf16.msra.mxu0 %v407
    %636 = vmatprep.subr.bf16.mxu0 %v416
    %637 = vmatpush1.bf16.msra.mxu0 %v415
    %638 = vmatprep.subr.bf16.mxu0 %v424
    %639 = vmatpush1.bf16.msra.mxu0 %v423
    %640 = vmatprep.subr.bf16.mxu0 %v432
    %641 = vmatpush1.bf16.msra.mxu0 %v431
    %642 = vmatprep.subr.bf16.mxu0 %v440
    %643 = vmatpush1.bf16.msra.mxu0 %v439
    %644 = vmatprep.subr.bf16.mxu0 0
    %645 = vmatpush1.bf16.msra.mxu0 0
    %646 = vmatprep.subr.bf16.mxu0 0
    %647 = vmatpush1.bf16.msra.mxu0 0
    %648 = vmatprep.subr.bf16.mxu0 0
    %649 = vmatpush1.bf16.msra.mxu0 0
    %650 = vmatprep.subr.bf16.mxu0 0
    %651 = vmatpush1.bf16.msra.mxu0 0
    %652 = vmatprep.subr.bf16.mxu0 0
    %653 = vmatpush1.bf16.msra.mxu0 0
    %654 = vmatprep.subr.bf16.mxu0 0
    %655 = vmatpush1.bf16.msra.mxu0 0
    %656 = vmatprep.subr.bf16.mxu0 0
    %657 = vmatpush1.bf16.msra.mxu0 0
    %658 = vmatprep.subr.bf16.mxu0 0
    %659 = vmatpush1.bf16.msra.mxu0 0
    %660 = vmatprep.mubr.bf16.mxu0 0
    %661 = vmatmul.mubr.bf16.gmra.mrb[0].mxu0 %v120
    %v662 = vpop.f32.mrb[0].mxu0
    %v663 = vadd.f32 0.0, %v662
    %v664 = vpop.f32.mrb[0].mxu0
    %v665 = vadd.f32 0.0, %v664
    %v666 = vpop.f32.mrb[0].mxu0
    %v667 = vpop.f32.mrb[0].mxu0
    %668 = vdwg.mxu0
    %v669 = vld [vmem:[%s4] sm:$0xf]
    %v671 = vlaneseq
    %v672 = vshrl.u32 %v671, 7
    %v673 = vsub.s32 0, %v672
    %v674 = vrot.slane %v669, %v673
    %v675 = vlaneseq
    %v676 = vshrl.u32 %v675, 7
    %v677 = vsub.s32 1, %v676
    %v678 = vrot.slane %v669, %v677
    %v679 = vlaneseq
    %v680 = vshrl.u32 %v679, 7
    %v681 = vsub.s32 2, %v680
    %v682 = vrot.slane %v669, %v681
    %v683 = vlaneseq
    %v684 = vshrl.u32 %v683, 7
    %v685 = vsub.s32 3, %v684
    %v686 = vrot.slane %v669, %v685
    %v691 = vadd.f32 %v540, %v674
    %v692 = vadd.f32 %v542, %v678
    %v693 = vadd.f32 %v581, %v682
    %v694 = vadd.f32 %v583, %v686
    %v695 = vxor.u32 %v691, 2147483648
    %v696 = vxor.u32 %v692, 2147483648
    %v697 = vxor.u32 %v693, 2147483648
    %v698 = vmul.f32 %v695, 1.442695
    %v699 = vpow.pop %v698
    %v700 = vmul.f32 %v696, 1.442695
    %v701 = vpow.pop %v700
    %v702 = vmul.f32 %v697, 1.442695
    %v703 = vpow.pop %v702
    %v704 = vadd.f32 %v699, 1.0
    %v705 = vadd.f32 %v701, 1.0
    %v706 = vadd.f32 %v703, 1.0
    %v707 = vrcp.pop %v704
    %v708 = vmul.f32 1.0, %v707
    %v709 = vrcp.pop %v705
    %v710 = vmul.f32 1.0, %v709
    %v711 = vrcp.pop %v706
    %v712 = vmul.f32 1.0, %v711
    %v713 = vtanh.pop %v694
    %v714 = vmul.f32 %v710, %v118
    %v715 = vmul.f32 %v708, %v713
    %v716 = vadd.f32 %v714, %v715
    %v717 = vtanh.pop %v716
    %v718 = vmul.f32 %v712, %v717
    %v719 = vpack.c.bf16 %v718, %v718
    %v720 = vld [vmem:[#allocation8] sm:$0xff]
    %v721 = vld [vmem:[#allocation8 + $0x8] sm:$0xff]
    %v722 = vld [vmem:[#allocation8 + $0x10] sm:$0xff]
    %v723 = vld [vmem:[#allocation8 + $0x18] sm:$0xff]
    %v724 = vld [vmem:[#allocation8 + $0x20] sm:$0xff]
    %v725 = vld [vmem:[#allocation8 + $0x28] sm:$0xff]
    %v726 = vld [vmem:[#allocation8 + $0x30] sm:$0xff]
    %v727 = vld [vmem:[#allocation8 + $0x38] sm:$0xff]
    %v728 = vld [vmem:[#allocation8 + $0x40] sm:$0xff]
    %v729 = vld [vmem:[#allocation8 + $0x48] sm:$0xff]
    %v730 = vld [vmem:[#allocation8 + $0x50] sm:$0xff]
    %v731 = vld [vmem:[#allocation8 + $0x58] sm:$0xff]
    %v732 = vld [vmem:[#allocation8 + $0x60] sm:$0xff]
    %v733 = vld [vmem:[#allocation8 + $0x68] sm:$0xff]
    %v734 = vld [vmem:[#allocation8 + $0x70] sm:$0xff]
    %v735 = vld [vmem:[#allocation8 + $0x78] sm:$0xff]
    %v736 = vld [vmem:[#allocation8 + $0x80] sm:$0xff]
    %v737 = vld [vmem:[#allocation8 + $0x88] sm:$0xff]
    %v738 = vld [vmem:[#allocation8 + $0x90] sm:$0xff]
    %v739 = vld [vmem:[#allocation8 + $0x98] sm:$0xff]
    %v740 = vld [vmem:[#allocation8 + $0xa0] sm:$0xff]
    %v741 = vld [vmem:[#allocation8 + $0xa8] sm:$0xff]
    %v742 = vld [vmem:[#allocation8 + $0xb0] sm:$0xff]
    %v743 = vld [vmem:[#allocation8 + $0xb8] sm:$0xff]
    %v744 = vld [vmem:[#allocation8 + $0xc0] sm:$0xff]
    %v745 = vld [vmem:[#allocation8 + $0xc8] sm:$0xff]
    %v746 = vld [vmem:[#allocation8 + $0xd0] sm:$0xff]
    %v747 = vld [vmem:[#allocation8 + $0xd8] sm:$0xff]
    %v748 = vld [vmem:[#allocation8 + $0xe0] sm:$0xff]
    %v749 = vld [vmem:[#allocation8 + $0xe8] sm:$0xff]
    %v750 = vld [vmem:[#allocation8 + $0xf0] sm:$0xff]
    %v751 = vld [vmem:[#allocation8 + $0xf8] sm:$0xff]
    %v784 = vunpack.c.l.b16 %v720
    %v785 = vunpack.c.h.b16 %v720
    %v786 = vunpack.c.l.b16 %v721
    %v787 = vunpack.c.h.b16 %v721
    %v788 = vunpack.c.l.b16 %v722
    %v789 = vunpack.c.h.b16 %v722
    %v790 = vunpack.c.l.b16 %v723
    %v791 = vunpack.c.h.b16 %v723
    %v792 = vunpack.c.l.b16 %v724
    %v793 = vunpack.c.h.b16 %v724
    %v794 = vunpack.c.l.b16 %v725
    %v795 = vunpack.c.h.b16 %v725
    %v796 = vunpack.c.l.b16 %v726
    %v797 = vunpack.c.h.b16 %v726
    %v798 = vunpack.c.l.b16 %v727
    %v799 = vunpack.c.h.b16 %v727
    %v800 = vunpack.c.l.b16 %v728
    %v801 = vunpack.c.h.b16 %v728
    %v802 = vunpack.c.l.b16 %v729
    %v803 = vunpack.c.h.b16 %v729
    %v804 = vunpack.c.l.b16 %v730
    %v805 = vunpack.c.h.b16 %v730
    %v806 = vunpack.c.l.b16 %v731
    %v807 = vunpack.c.h.b16 %v731
    %v808 = vunpack.c.l.b16 %v732
    %v809 = vunpack.c.h.b16 %v732
    %v810 = vunpack.c.l.b16 %v733
    %v811 = vunpack.c.h.b16 %v733
    %v812 = vunpack.c.l.b16 %v734
    %v813 = vunpack.c.h.b16 %v734
    %v814 = vunpack.c.l.b16 %v735
    %v815 = vunpack.c.h.b16 %v735
    %v816 = vunpack.c.l.b16 %v736
    %v817 = vunpack.c.h.b16 %v736
    %v818 = vunpack.c.l.b16 %v737
    %v819 = vunpack.c.h.b16 %v737
    %v820 = vunpack.c.l.b16 %v738
    %v821 = vunpack.c.h.b16 %v738
    %v822 = vunpack.c.l.b16 %v739
    %v823 = vunpack.c.h.b16 %v739
    %v824 = vunpack.c.l.b16 %v740
    %v825 = vunpack.c.h.b16 %v740
    %v826 = vunpack.c.l.b16 %v741
    %v827 = vunpack.c.h.b16 %v741
    %v828 = vunpack.c.l.b16 %v742
    %v829 = vunpack.c.h.b16 %v742
    %v830 = vunpack.c.l.b16 %v743
    %v831 = vunpack.c.h.b16 %v743
    %v832 = vunpack.c.l.b16 %v744
    %v833 = vunpack.c.h.b16 %v744
    %v834 = vunpack.c.l.b16 %v745
    %v835 = vunpack.c.h.b16 %v745
    %v836 = vunpack.c.l.b16 %v746
    %v837 = vunpack.c.h.b16 %v746
    %v838 = vunpack.c.l.b16 %v747
    %v839 = vunpack.c.h.b16 %v747
    %v840 = vunpack.c.l.b16 %v748
    %v841 = vunpack.c.h.b16 %v748
    %v842 = vunpack.c.l.b16 %v749
    %v843 = vunpack.c.h.b16 %v749
    %v844 = vunpack.c.l.b16 %v750
    %v845 = vunpack.c.h.b16 %v750
    %v846 = vunpack.c.l.b16 %v751
    %v847 = vunpack.c.h.b16 %v751
    %v848 = vpack.c.b16 %v788, %v784
    %v849 = vpack.c.b16 %v789, %v785
    %v850 = vpack.c.b16 %v790, %v786
    %v851 = vpack.c.b16 %v791, %v787
    %v852 = vpack.c.b16 %v796, %v792
    %v853 = vpack.c.b16 %v797, %v793
    %v854 = vpack.c.b16 %v798, %v794
    %v855 = vpack.c.b16 %v799, %v795
    %v856 = vpack.c.b16 %v804, %v800
    %v857 = vpack.c.b16 %v805, %v801
    %v858 = vpack.c.b16 %v806, %v802
    %v859 = vpack.c.b16 %v807, %v803
    %v860 = vpack.c.b16 %v812, %v808
    %v861 = vpack.c.b16 %v813, %v809
    %v862 = vpack.c.b16 %v814, %v810
    %v863 = vpack.c.b16 %v815, %v811
    %v864 = vpack.c.b16 %v820, %v816
    %v865 = vpack.c.b16 %v821, %v817
    %v866 = vpack.c.b16 %v822, %v818
    %v867 = vpack.c.b16 %v823, %v819
    %v868 = vpack.c.b16 %v828, %v824
    %v869 = vpack.c.b16 %v829, %v825
    %v870 = vpack.c.b16 %v830, %v826
    %v871 = vpack.c.b16 %v831, %v827
    %v872 = vpack.c.b16 %v836, %v832
    %v873 = vpack.c.b16 %v837, %v833
    %v874 = vpack.c.b16 %v838, %v834
    %v875 = vpack.c.b16 %v839, %v835
    %v876 = vpack.c.b16 %v844, %v840
    %v877 = vpack.c.b16 %v845, %v841
    %v878 = vpack.c.b16 %v846, %v842
    %v879 = vpack.c.b16 %v847, %v843
    %912 = vmatprep.subr.bf16.mxu0 %v849
    %913 = vmatpush1.bf16.msra.mxu0 %v848
    %914 = vmatprep.subr.bf16.mxu0 %v853
    %915 = vmatpush1.bf16.msra.mxu0 %v852
    %916 = vmatprep.subr.bf16.mxu0 %v857
    %917 = vmatpush1.bf16.msra.mxu0 %v856
    %918 = vmatprep.subr.bf16.mxu0 %v861
    %919 = vmatpush1.bf16.msra.mxu0 %v860
    %920 = vmatprep.subr.bf16.mxu0 %v865
    %921 = vmatpush1.bf16.msra.mxu0 %v864
    %922 = vmatprep.subr.bf16.mxu0 %v869
    %923 = vmatpush1.bf16.msra.mxu0 %v868
    %924 = vmatprep.subr.bf16.mxu0 %v873
    %925 = vmatpush1.bf16.msra.mxu0 %v872
    %926 = vmatprep.subr.bf16.mxu0 %v877
    %927 = vmatpush1.bf16.msra.mxu0 %v876
    %928 = vmatprep.subr.bf16.mxu0 0
    %929 = vmatpush1.bf16.msra.mxu0 0
    %930 = vmatprep.subr.bf16.mxu0 0
    %931 = vmatpush1.bf16.msra.mxu0 0
    %932 = vmatprep.subr.bf16.mxu0 0
    %933 = vmatpush1.bf16.msra.mxu0 0
    %934 = vmatprep.subr.bf16.mxu0 0
    %935 = vmatpush1.bf16.msra.mxu0 0
    %936 = vmatprep.subr.bf16.mxu0 0
    %937 = vmatpush1.bf16.msra.mxu0 0
    %938 = vmatprep.subr.bf16.mxu0 0
    %939 = vmatpush1.bf16.msra.mxu0 0
    %940 = vmatprep.subr.bf16.mxu0 0
    %941 = vmatpush1.bf16.msra.mxu0 0
    %942 = vmatprep.subr.bf16.mxu0 0
    %943 = vmatpush1.bf16.msra.mxu0 0
    %944 = vmatprep.mubr.bf16.mxu0 0
    %945 = vmatmul.mubr.bf16.gmra.mrb[0].mxu0 %v719
    %v946 = vpop.f32.mrb[0].mxu0
    %v947 = vadd.f32 0.0, %v946
    %v948 = vpop.f32.mrb[0].mxu0
    %v949 = vadd.f32 0.0, %v948
    %v950 = vpop.f32.mrb[0].mxu0
    %v951 = vpop.f32.mrb[0].mxu0
    %952 = vdwg.mxu0
    %953 = vmatprep.subr.bf16.mxu0 %v851
    %954 = vmatpush1.bf16.msra.mxu0 %v850
    %955 = vmatprep.subr.bf16.mxu0 %v855
    %956 = vmatpush1.bf16.msra.mxu0 %v854
    %957 = vmatprep.subr.bf16.mxu0 %v859
    %958 = vmatpush1.bf16.msra.mxu0 %v858
    %959 = vmatprep.subr.bf16.mxu0 %v863
    %960 = vmatpush1.bf16.msra.mxu0 %v862
    %961 = vmatprep.subr.bf16.mxu0 %v867
    %962 = vmatpush1.bf16.msra.mxu0 %v866
    %963 = vmatprep.subr.bf16.mxu0 %v871
    %964 = vmatpush1.bf16.msra.mxu0 %v870
    %965 = vmatprep.subr.bf16.mxu0 %v875
    %966 = vmatpush1.bf16.msra.mxu0 %v874
    %967 = vmatprep.subr.bf16.mxu0 %v879
    %968 = vmatpush1.bf16.msra.mxu0 %v878
    %969 = vmatprep.subr.bf16.mxu0 0
    %970 = vmatpush1.bf16.msra.mxu0 0
    %971 = vmatprep.subr.bf16.mxu0 0
    %972 = vmatpush1.bf16.msra.mxu0 0
    %973 = vmatprep.subr.bf16.mxu0 0
    %974 = vmatpush1.bf16.msra.mxu0 0
    %975 = vmatprep.subr.bf16.mxu0 0
    %976 = vmatpush1.bf16.msra.mxu0 0
    %977 = vmatprep.subr.bf16.mxu0 0
    %978 = vmatpush1.bf16.msra.mxu0 0
    %979 = vmatprep.subr.bf16.mxu0 0
    %980 = vmatpush1.bf16.msra.mxu0 0
    %981 = vmatprep.subr.bf16.mxu0 0
    %982 = vmatpush1.bf16.msra.mxu0 0
    %983 = vmatprep.subr.bf16.mxu0 0
    %984 = vmatpush1.bf16.msra.mxu0 0
    %985 = vmatprep.mubr.bf16.mxu0 0
    %986 = vmatmul.mubr.bf16.gmra.mrb[0].mxu0 %v719
    %v987 = vpop.f32.mrb[0].mxu0
    %v988 = vadd.f32 0.0, %v987
    %v989 = vpop.f32.mrb[0].mxu0
    %v990 = vadd.f32 0.0, %v989
    %v991 = vpop.f32.mrb[0].mxu0
    %v992 = vpop.f32.mrb[0].mxu0
    %993 = vdwg.mxu0
    %v994 = vadd.f32 %v622, %v947
    %v995 = vadd.f32 %v624, %v949
    %v996 = vadd.f32 %v663, %v988
    %v997 = vadd.f32 %v665, %v990
    %v998 = vld [vmem:[%s5] sm:$0xf]
    %v1000 = vlaneseq
    %v1001 = vshrl.u32 %v1000, 7
    %v1002 = vsub.s32 0, %v1001
    %v1003 = vrot.slane %v998, %v1002
    %v1004 = vlaneseq
    %v1005 = vshrl.u32 %v1004, 7
    %v1006 = vsub.s32 1, %v1005
    %v1007 = vrot.slane %v998, %v1006
    %v1008 = vlaneseq
    %v1009 = vshrl.u32 %v1008, 7
    %v1010 = vsub.s32 2, %v1009
    %v1011 = vrot.slane %v998, %v1010
    %v1012 = vlaneseq
    %v1013 = vshrl.u32 %v1012, 7
    %v1014 = vsub.s32 3, %v1013
    %v1015 = vrot.slane %v998, %v1014
    %v1020 = vadd.f32 %v994, %v1003
    %v1021 = vadd.f32 %v995, %v1007
    %v1022 = vadd.f32 %v996, %v1011
    %v1023 = vadd.f32 %v997, %v1015
    %v1024 = vxor.u32 %v1020, 2147483648
    %v1025 = vxor.u32 %v1021, 2147483648
    %v1026 = vxor.u32 %v1022, 2147483648
    %v1027 = vmul.f32 %v1024, 1.442695
    %v1028 = vpow.pop %v1027
    %v1029 = vmul.f32 %v1025, 1.442695
    %v1030 = vpow.pop %v1029
    %v1031 = vmul.f32 %v1026, 1.442695
    %v1032 = vpow.pop %v1031
    %v1033 = vadd.f32 %v1028, 1.0
    %v1034 = vadd.f32 %v1030, 1.0
    %v1035 = vadd.f32 %v1032, 1.0
    %v1036 = vrcp.pop %v1033
    %v1037 = vmul.f32 1.0, %v1036
    %v1038 = vrcp.pop %v1034
    %v1039 = vmul.f32 1.0, %v1038
    %v1040 = vrcp.pop %v1035
    %v1041 = vmul.f32 1.0, %v1040
    %v1042 = vtanh.pop %v1023
    %v1043 = vmul.f32 %v1039, %v716
    %v1044 = vmul.f32 %v1037, %v1042
    %v1045 = vadd.f32 %v1043, %v1044
    %v1046 = vtanh.pop %v1045
    %v1047 = vmul.f32 %v1041, %v1046
    %v1048 = vld [vmem:[#allocation10] sm:$0xf]
    %v1049 = vld [vmem:[#allocation10 + $0x4] sm:$0xf]
    %v1050 = vld [vmem:[#allocation10 + $0x8] sm:$0xf]
    %v1051 = vld [vmem:[#allocation10 + $0xc] sm:$0xf]
    %v1052 = vld [vmem:[#allocation10 + $0x10] sm:$0xf]
    %v1053 = vld [vmem:[#allocation10 + $0x14] sm:$0xf]
    %v1054 = vld [vmem:[#allocation10 + $0x18] sm:$0xf]
    %v1055 = vld [vmem:[#allocation10 + $0x1c] sm:$0xf]
    %v1056 = vld [vmem:[#allocation10 + $0x20] sm:$0xf]
    %v1057 = vld [vmem:[#allocation10 + $0x24] sm:$0xf]
    %v1058 = vld [vmem:[#allocation10 + $0x28] sm:$0xf]
    %v1059 = vld [vmem:[#allocation10 + $0x2c] sm:$0xf]
    %v1060 = vld [vmem:[#allocation10 + $0x30] sm:$0xf]
    %v1061 = vld [vmem:[#allocation10 + $0x34] sm:$0xf]
    %v1062 = vld [vmem:[#allocation10 + $0x38] sm:$0xf]
    %v1063 = vld [vmem:[#allocation10 + $0x3c] sm:$0xf]
    %v1064 = vld [vmem:[%s7] sm:$0x1]
    %v1066 = vlaneseq
    %v1067 = vshrl.u32 %v1066, 7
    %v1068 = vsub.s32 0, %v1067
    %v1069 = vrot.slane %v1064, %v1068
    %v1087 = vunpack.c.l.b16 %v1048
    %v1088 = vunpack.c.l.b16 %v1049
    %v1089 = vunpack.c.l.b16 %v1050
    %v1090 = vunpack.c.l.b16 %v1051
    %v1091 = vunpack.c.l.b16 %v1052
    %v1092 = vunpack.c.l.b16 %v1053
    %v1093 = vunpack.c.l.b16 %v1054
    %v1094 = vunpack.c.l.b16 %v1055
    %v1095 = vunpack.c.l.b16 %v1056
    %v1096 = vunpack.c.l.b16 %v1057
    %v1097 = vunpack.c.l.b16 %v1058
    %v1098 = vunpack.c.l.b16 %v1059
    %v1099 = vunpack.c.l.b16 %v1060
    %v1100 = vunpack.c.l.b16 %v1061
    %v1101 = vunpack.c.l.b16 %v1062
    %v1102 = vunpack.c.l.b16 %v1063
    %v1103 = vpack.c.b16 %v1088, %v1087
    %v1104 = vpack.c.b16 %v1090, %v1089
    %v1105 = vpack.c.b16 %v1092, %v1091
    %v1106 = vpack.c.b16 %v1094, %v1093
    %v1107 = vpack.c.b16 %v1096, %v1095
    %v1108 = vpack.c.b16 %v1098, %v1097
    %v1109 = vpack.c.b16 %v1100, %v1099
    %v1110 = vpack.c.b16 %v1102, %v1101
    %1119 = vmatprep.subr.bf16.mxu0 0
    %1120 = vmatpush1.bf16.msra.mxu0 %v1103
    %1121 = vmatprep.subr.bf16.mxu0 0
    %1122 = vmatpush1.bf16.msra.mxu0 %v1104
    %1123 = vmatprep.subr.bf16.mxu0 0
    %1124 = vmatpush1.bf16.msra.mxu0 %v1105
    %1125 = vmatprep.subr.bf16.mxu0 0
    %1126 = vmatpush1.bf16.msra.mxu0 %v1106
    %1127 = vmatprep.subr.bf16.mxu0 0
    %1128 = vmatpush1.bf16.msra.mxu0 %v1107
    %1129 = vmatprep.subr.bf16.mxu0 0
    %1130 = vmatpush1.bf16.msra.mxu0 %v1108
    %1131 = vmatprep.subr.bf16.mxu0 0
    %1132 = vmatpush1.bf16.msra.mxu0 %v1109
    %1133 = vmatprep.subr.bf16.mxu0 0
    %1134 = vmatpush1.bf16.msra.mxu0 %v1110
    %1135 = vmatprep.subr.bf16.mxu0 0
    %1136 = vmatpush1.bf16.msra.mxu0 0
    %1137 = vmatprep.subr.bf16.mxu0 0
    %1138 = vmatpush1.bf16.msra.mxu0 0
    %1139 = vmatprep.subr.bf16.mxu0 0
    %1140 = vmatpush1.bf16.msra.mxu0 0
    %1141 = vmatprep.subr.bf16.mxu0 0
    %1142 = vmatpush1.bf16.msra.mxu0 0
    %1143 = vmatprep.subr.bf16.mxu0 0
    %1144 = vmatpush1.bf16.msra.mxu0 0
    %1145 = vmatprep.subr.bf16.mxu0 0
    %1146 = vmatpush1.bf16.msra.mxu0 0
    %1147 = vmatprep.subr.bf16.mxu0 0
    %1148 = vmatpush1.bf16.msra.mxu0 0
    %1149 = vmatprep.subr.bf16.mxu0 0
    %1150 = vmatpush1.bf16.msra.mxu0 0
    %1151 = vmatprep.mubr.bf16.mxu0 0
    %1152 = vmatmul.mubr.bf16.gmra.mrb[0].mxu0 %v719
    %v1153 = vpop.f32.mrb[0].mxu0
    %v1154 = vadd.f32 %v1069, %v1153
    %v1155 = vpop.f32.mrb[0].mxu0
    %v1156 = vpop.f32.mrb[0].mxu0
    %v1157 = vpop.f32.mrb[0].mxu0
    %1158 = vdwg.mxu0
    %1159 = vst [vmem:[#allocation13] sm:$0xff] %v1154
    %v1160 = vpack.c.bf16 %v1047, %v1047
    %v1161 = vld [vmem:[#allocation11] sm:$0xf]
    %v1162 = vld [vmem:[#allocation11 + $0x4] sm:$0xf]
    %v1163 = vld [vmem:[#allocation11 + $0x8] sm:$0xf]
    %v1164 = vld [vmem:[#allocation11 + $0xc] sm:$0xf]
    %v1165 = vld [vmem:[#allocation11 + $0x10] sm:$0xf]
    %v1166 = vld [vmem:[#allocation11 + $0x14] sm:$0xf]
    %v1167 = vld [vmem:[#allocation11 + $0x18] sm:$0xf]
    %v1168 = vld [vmem:[#allocation11 + $0x1c] sm:$0xf]
    %v1169 = vld [vmem:[#allocation11 + $0x20] sm:$0xf]
    %v1170 = vld [vmem:[#allocation11 + $0x24] sm:$0xf]
    %v1171 = vld [vmem:[#allocation11 + $0x28] sm:$0xf]
    %v1172 = vld [vmem:[#allocation11 + $0x2c] sm:$0xf]
    %v1173 = vld [vmem:[#allocation11 + $0x30] sm:$0xf]
    %v1174 = vld [vmem:[#allocation11 + $0x34] sm:$0xf]
    %v1175 = vld [vmem:[#allocation11 + $0x38] sm:$0xf]
    %v1176 = vld [vmem:[#allocation11 + $0x3c] sm:$0xf]
    %v1177 = vld [vmem:[%s9] sm:$0x1]
    %v1179 = vlaneseq
    %v1180 = vshrl.u32 %v1179, 7
    %v1181 = vsub.s32 0, %v1180
    %v1182 = vrot.slane %v1177, %v1181
    %v1200 = vunpack.c.l.b16 %v1161
    %v1201 = vunpack.c.l.b16 %v1162
    %v1202 = vunpack.c.l.b16 %v1163
    %v1203 = vunpack.c.l.b16 %v1164
    %v1204 = vunpack.c.l.b16 %v1165
    %v1205 = vunpack.c.l.b16 %v1166
    %v1206 = vunpack.c.l.b16 %v1167
    %v1207 = vunpack.c.l.b16 %v1168
    %v1208 = vunpack.c.l.b16 %v1169
    %v1209 = vunpack.c.l.b16 %v1170
    %v1210 = vunpack.c.l.b16 %v1171
    %v1211 = vunpack.c.l.b16 %v1172
    %v1212 = vunpack.c.l.b16 %v1173
    %v1213 = vunpack.c.l.b16 %v1174
    %v1214 = vunpack.c.l.b16 %v1175
    %v1215 = vunpack.c.l.b16 %v1176
    %v1216 = vpack.c.b16 %v1201, %v1200
    %v1217 = vpack.c.b16 %v1203, %v1202
    %v1218 = vpack.c.b16 %v1205, %v1204
    %v1219 = vpack.c.b16 %v1207, %v1206
    %v1220 = vpack.c.b16 %v1209, %v1208
    %v1221 = vpack.c.b16 %v1211, %v1210
    %v1222 = vpack.c.b16 %v1213, %v1212
    %v1223 = vpack.c.b16 %v1215, %v1214
    %1232 = vmatprep.subr.bf16.mxu0 0
    %1233 = vmatpush1.bf16.msra.mxu0 %v1216
    %1234 = vmatprep.subr.bf16.mxu0 0
    %1235 = vmatpush1.bf16.msra.mxu0 %v1217
    %1236 = vmatprep.subr.bf16.mxu0 0
    %1237 = vmatpush1.bf16.msra.mxu0 %v1218
    %1238 = vmatprep.subr.bf16.mxu0 0
    %1239 = vmatpush1.bf16.msra.mxu0 %v1219
    %1240 = vmatprep.subr.bf16.mxu0 0
    %1241 = vmatpush1.bf16.msra.mxu0 %v1220
    %1242 = vmatprep.subr.bf16.mxu0 0
    %1243 = vmatpush1.bf16.msra.mxu0 %v1221
    %1244 = vmatprep.subr.bf16.mxu0 0
    %1245 = vmatpush1.bf16.msra.mxu0 %v1222
    %1246 = vmatprep.subr.bf16.mxu0 0
    %1247 = vmatpush1.bf16.msra.mxu0 %v1223
    %1248 = vmatprep.subr.bf16.mxu0 0
    %1249 = vmatpush1.bf16.msra.mxu0 0
    %1250 = vmatprep.subr.bf16.mxu0 0
    %1251 = vmatpush1.bf16.msra.mxu0 0
    %1252 = vmatprep.subr.bf16.mxu0 0
    %1253 = vmatpush1.bf16.msra.mxu0 0
    %1254 = vmatprep.subr.bf16.mxu0 0
    %1255 = vmatpush1.bf16.msra.mxu0 0
    %1256 = vmatprep.subr.bf16.mxu0 0
    %1257 = vmatpush1.bf16.msra.mxu0 0
    %1258 = vmatprep.subr.bf16.mxu0 0
    %1259 = vmatpush1.bf16.msra.mxu0 0
    %1260 = vmatprep.subr.bf16.mxu0 0
    %1261 = vmatpush1.bf16.msra.mxu0 0
    %1262 = vmatprep.subr.bf16.mxu0 0
    %1263 = vmatpush1.bf16.msra.mxu0 0
    %1264 = vmatprep.mubr.bf16.mxu0 0
    %1265 = vmatmul.mubr.bf16.gmra.mrb[0].mxu0 %v1160
    %v1266 = vpop.f32.mrb[0].mxu0
    %v1267 = vadd.f32 %v1182, %v1266
    %v1268 = vpop.f32.mrb[0].mxu0
    %v1269 = vpop.f32.mrb[0].mxu0
    %v1270 = vpop.f32.mrb[0].mxu0
    %1271 = vdwg.mxu0
    %1272 = vst [vmem:[#allocation14] sm:$0xff] %v1267
    // Predicated region
    $region66: #{lstm_decoder_forward.1} parent=1 // pred_check
      _
    $region67: #{lstm_decoder_forward.1} parent=1 // pred_check_branch
      %1274 = sbr.rel (0) target = $region69
    $region68: #{lstm_decoder_forward.1} parent=1 // pred_region
      %s1276 = ssub.s32 128, 128
      %1277 = vsyncadd [#allocation4], %s1276
      %s1279 = sshll.u32 [#allocation13], 4
      %s1280 = int_to_ptr.vmem [resolvable:$true] %s1279
      %1282 = dma.vmem_to_hbm [thread:$0]  %s1280, 128, %s10, [#allocation4]
    $region69: #{lstm_decoder_forward.1} parent=1 // pred_fallthru
      _
    // Predicated region
    $region70: #{lstm_decoder_forward.1} parent=1 // pred_check
      _
    $region71: #{lstm_decoder_forward.1} parent=1 // pred_check_branch
      %1284 = sbr.rel (0) target = $region73
    $region72: #{lstm_decoder_forward.1} parent=1 // pred_region
      %s1286 = ssub.s32 128, 128
      %1287 = vsyncadd [#allocation15], %s1286
      %s1289 = sshll.u32 [#allocation14], 4
      %s1290 = int_to_ptr.vmem [resolvable:$true] %s1289
      %1292 = dma.vmem_to_hbm [thread:$0]  %s1290, 128, %s11, [#allocation15]
    $region73: #{lstm_decoder_forward.1} parent=1 // pred_fallthru
      _
    // Predicated region
    $region74: #{lstm_decoder_forward.1} parent=1 // pred_check
      _
    $region75: #{lstm_decoder_forward.1} parent=1 // pred_check_branch
      %1294 = sbr.rel (0) target = $region77
    $region76: #{lstm_decoder_forward.1} parent=1 // pred_region
      %1295 = dma.done [#allocation4], 128
    $region77: #{lstm_decoder_forward.1} parent=1 // pred_fallthru
      _
    // Predicated region
    $region78: #{lstm_decoder_forward.1} parent=1 // pred_check
      _
    $region79: #{lstm_decoder_forward.1} parent=1 // pred_check_branch
      %1297 = sbr.rel (0) target = $region81
    $region80: #{lstm_decoder_forward.1} parent=1 // pred_region
      %1298 = dma.done [#allocation15], 128
    $region81: #{lstm_decoder_forward.1} parent=1 // pred_fallthru
      _
    %1299 = vsyncpa [#allocation3], 1
    %1300 = vsyncpa [#allocation6], 1
    %1301 = vsyncpa [#allocation9], 1
    %1302 = vsyncpa [#allocation12], 1
    %1303 = vsyncpa [#allocation4], 1
    %1304 = vsyncpa [#allocation15], 1

</llo_original>
